<compile_context>
chip_gen: v7x
topology: tpu7x:2x2x1
jax: 0.10.0
libtpu: 0.0.40
codegen_flags: <defaults>
</compile_context>

<pallas_src>
import functools

import jax
import jax.numpy as jnp
from jax.experimental import pallas as pl
from jax.experimental.pallas import tpu as pltpu

N_HEADS = 9
SUBLANE = 8
MAX_TILE_B = 1024   # sweep 1024-2048 if profiling shows remaining step overhead


def _round_up(x, m):
    return ((x + m - 1) // m) * m


def dqn_forward_kernel(x_ref,
                       w0_ref, b0_ref,
                       w1_ref, b1_ref,
                       w2_ref, b2_ref,
                       wh_ref, bh_ref,
                       out_ref):
    x = x_ref[...]

    # input_layer: (T, S) @ (S, 32) + (1, 32) -> ReLU
    h = jnp.dot(x, w0_ref[...], preferred_element_type=jnp.float32) + b0_ref[...]
    h = jnp.maximum(h, 0.0)

    # hidden_layer1: (T, 32) @ (32, 64) + (1, 64) -> ReLU
    h = jnp.dot(h, w1_ref[...], preferred_element_type=jnp.float32) + b1_ref[...]
    h = jnp.maximum(h, 0.0)

    # hidden_layer2: (T, 64) @ (64, 32) + (1, 32) -> ReLU
    h = jnp.dot(h, w2_ref[...], preferred_element_type=jnp.float32) + b2_ref[...]
    h = jnp.maximum(h, 0.0)

    # 9 heads packed: (T, 32) @ (32, 9*A) + (1, 9*A) -> ReLU (module uses
    # F.relu on every head), stored unpadded (lane width = 9*A).
    y = jnp.dot(h, wh_ref[...], preferred_element_type=jnp.float32) + bh_ref[...]
    out_ref[...] = jnp.maximum(y, 0.0).astype(out_ref.dtype)


@functools.partial(jax.jit, static_argnames=("num_actions",))
def dqn_forward(x, params, num_actions):
    """x: (B, NUM_STATES) f32.  Returns packed (B, 9, NUM_ACTIONS) f32."""
    (w0, b0, w1, b1, w2, b2, wh, bh) = params
    B, S = x.shape
    head_dim = N_HEADS * num_actions            # == wh.shape[1]

    # Large batch tile (amortize per-step overhead), multiple of 8 sublanes,
    # and no larger than half the batch so a 2-TC chip gets >= 2 grid steps.
    tile_b = min(MAX_TILE_B, _round_up(max(pl.cdiv(B, 2), 1), SUBLANE))
    grid = (pl.cdiv(B, tile_b),)                # Pallas masks the partial block

    inv = lambda arr: pl.BlockSpec(arr.shape, lambda i: (0, 0))  # grid-invariant

    out = pl.pallas_call(
        dqn_forward_kernel,
        out_shape=jax.ShapeDtypeStruct((B, head_dim), jnp.float32),
        grid=grid,
        in_specs=[
            pl.BlockSpec((tile_b, S), lambda i: (i, 0)),          # x tile
            inv(w0), inv(b0),
            inv(w1), inv(b1),
            inv(w2), inv(b2),
            inv(wh), inv(bh),
        ],
        out_specs=pl.BlockSpec((tile_b, head_dim), lambda i: (i, 0)),
        compiler_params=pltpu.CompilerParams(
            dimension_semantics=("parallel",)),
    )(x, w0, b0, w1, b1, w2, b2, wh, bh)

    # Contiguous packed heads: free reshape, no slicing pass.
    return out.reshape(B, N_HEADS, num_actions)


def split_heads(packed):
    """Compatibility helper reproducing the original 9-tuple return."""
    return tuple(packed[:, i, :] for i in range(N_HEADS))


def init_params(key, num_states, num_actions):
    """Deterministic synthetic init.

    Weights ~ N(0, 0.1) (matches `.data.normal_(0, 0.1)` in the module).
    Biases ~ U(-1/sqrt(fan_in), 1/sqrt(fan_in)) (PyTorch Linear default).
    Weights are stored transposed: (in_features, out_features).
    The 9 head weights/biases are packed along the output axis (no lane
    padding — the kernel writes the 9*A-wide output directly).
    """
    keys = jax.random.split(key, 26)
    ki = iter(range(26))

    def linear(in_f, out_f):
        w = 0.1 * jax.random.normal(keys[next(ki)], (in_f, out_f), jnp.float32)
        bound = 1.0 / jnp.sqrt(jnp.float32(in_f))
        b = jax.random.uniform(keys[next(ki)], (1, out_f), jnp.float32,
                               minval=-bound, maxval=bound)
        return w, b

    w0, b0 = linear(num_states, 32)
    w1, b1 = linear(32, 64)
    w2, b2 = linear(64, 32)

    head_ws, head_bs = [], []
    for _ in range(N_HEADS):
        w, b = linear(32, num_actions)
        head_ws.append(w)
        head_bs.append(b)
    wh = jnp.concatenate(head_ws, axis=1)        # (32, 9*A)
    bh = jnp.concatenate(head_bs, axis=1)        # (1, 9*A)

    return (w0, b0, w1, b1, w2, b2, wh, bh)


def reference_forward(x, params, num_actions):
    (w0, b0, w1, b1, w2, b2, wh, bh) = params
    h = jnp.maximum(x @ w0 + b0, 0.0)
    h = jnp.maximum(h @ w1 + b1, 0.0)
    h = jnp.maximum(h @ w2 + b2, 0.0)
    y = jnp.maximum(h @ wh + bh, 0.0)            # heads keep ReLU (matches module)
    return y.reshape(x.shape[0], N_HEADS, num_actions)


if __name__ == "__main__":
    NUM_STATES = 8
    NUM_ACTIONS = 4
    BATCH = 2

    key = jax.random.PRNGKey(0)
    k_x, k_p, k_x2 = jax.random.split(key, 3)

    params = init_params(k_p, NUM_STATES, NUM_ACTIONS)

    # Small-batch check (single partial block).
    x = jax.random.normal(k_x, (BATCH, NUM_STATES), jnp.float32)
    packed = jax.block_until_ready(dqn_forward(x, params, NUM_ACTIONS))
    ref = reference_forward(x, params, NUM_ACTIONS)
    assert packed.shape == (BATCH, N_HEADS, NUM_ACTIONS)
    assert jnp.allclose(packed, ref, atol=1e-5, rtol=1e-5)

    heads = split_heads(packed)
    for i, o in enumerate(heads):
        assert o.shape == (BATCH, NUM_ACTIONS)
        assert jnp.allclose(o, ref[:, i, :], atol=1e-5, rtol=1e-5)

    # Multi-step grid + partial last block check (B not a multiple of tile_b).
    B2 = 250
    x2 = jax.random.normal(k_x2, (B2, NUM_STATES), jnp.float32)
    packed2 = jax.block_until_ready(dqn_forward(x2, params, NUM_ACTIONS))
    ref2 = reference_forward(x2, params, NUM_ACTIONS)
    assert packed2.shape == (B2, N_HEADS, NUM_ACTIONS)
    assert jnp.allclose(packed2, ref2, atol=1e-5, rtol=1e-5)

    print("KERNEL_OK")
</pallas_src>

<mosaic_0001>
module attributes {stable_mosaic.version = 11 : i64} {
  func.func @dqn_forward_kernel(%arg0: i32, %arg1: memref<8x8xf32, #tpu.memory_space<vmem>>, %arg2: memref<8x32xf32, #tpu.memory_space<vmem>>, %arg3: memref<1x32xf32, #tpu.memory_space<vmem>>, %arg4: memref<32x64xf32, #tpu.memory_space<vmem>>, %arg5: memref<1x64xf32, #tpu.memory_space<vmem>>, %arg6: memref<64x32xf32, #tpu.memory_space<vmem>>, %arg7: memref<1x32xf32, #tpu.memory_space<vmem>>, %arg8: memref<32x36xf32, #tpu.memory_space<vmem>>, %arg9: memref<1x36xf32, #tpu.memory_space<vmem>>, %arg10: memref<8x36xf32, #tpu.memory_space<vmem>>) attributes {dimension_semantics = [#tpu.dimension_semantics<parallel>], iteration_bounds = array<i64: 1>, scalar_prefetch = 0 : i64, scratch_operands = 0 : i64, tpu.core_type = #tpu.core_type<tc>, window_params = [{transform_indices = @transform_0, window_bounds = array<i64: 8, 8>}, {pipeline_mode = #tpu.pipeline_mode<synchronous>, transform_indices = @transform_1, window_bounds = array<i64: 8, 32>}, {pipeline_mode = #tpu.pipeline_mode<synchronous>, transform_indices = @transform_2, window_bounds = array<i64: 1, 32>}, {pipeline_mode = #tpu.pipeline_mode<synchronous>, transform_indices = @transform_3, window_bounds = array<i64: 32, 64>}, {pipeline_mode = #tpu.pipeline_mode<synchronous>, transform_indices = @transform_4, window_bounds = array<i64: 1, 64>}, {pipeline_mode = #tpu.pipeline_mode<synchronous>, transform_indices = @transform_5, window_bounds = array<i64: 64, 32>}, {pipeline_mode = #tpu.pipeline_mode<synchronous>, transform_indices = @transform_6, window_bounds = array<i64: 1, 32>}, {pipeline_mode = #tpu.pipeline_mode<synchronous>, transform_indices = @transform_7, window_bounds = array<i64: 32, 36>}, {pipeline_mode = #tpu.pipeline_mode<synchronous>, transform_indices = @transform_8, window_bounds = array<i64: 1, 36>}, {transform_indices = @transform_9, window_bounds = array<i64: 8, 36>}]} {
    %c0 = arith.constant 0 : index
    %c0_0 = arith.constant 0 : index
    %0 = vector.load %arg1[%c0, %c0_0] : memref<8x8xf32, #tpu.memory_space<vmem>>, vector<8x8xf32>
    %c0_1 = arith.constant 0 : index
    %c0_2 = arith.constant 0 : index
    %1 = vector.load %arg2[%c0_1, %c0_2] : memref<8x32xf32, #tpu.memory_space<vmem>>, vector<8x32xf32>
    %cst = arith.constant dense<0.000000e+00> : vector<8x32xf32>
    %2 = tpu.matmul %0, %1, %cst {dimension_numbers = #tpu.dot_dimension_numbers<[1], [0], [0], [1], [0, 0, 1, 1], [], []>} : vector<8x8xf32>, vector<8x32xf32>, vector<8x32xf32> -> vector<8x32xf32>
    %c0_3 = arith.constant 0 : index
    %c0_4 = arith.constant 0 : index
    %3 = vector.load %arg3[%c0_3, %c0_4] : memref<1x32xf32, #tpu.memory_space<vmem>>, vector<1x32xf32>
    %4 = vector.broadcast %3 : vector<1x32xf32> to vector<8x32xf32>
    %5 = arith.addf %2, %4 : vector<8x32xf32>
    %cst_5 = arith.constant 0.000000e+00 : f32
    %6 = vector.broadcast %cst_5 : f32 to vector<8x32xf32>
    %7 = arith.maximumf %5, %6 : vector<8x32xf32>
    %c0_6 = arith.constant 0 : index
    %c0_7 = arith.constant 0 : index
    %8 = vector.load %arg4[%c0_6, %c0_7] : memref<32x64xf32, #tpu.memory_space<vmem>>, vector<32x64xf32>
    %cst_8 = arith.constant dense<0.000000e+00> : vector<8x64xf32>
    %9 = tpu.matmul %7, %8, %cst_8 {dimension_numbers = #tpu.dot_dimension_numbers<[1], [0], [0], [1], [0, 0, 1, 1], [], []>} : vector<8x32xf32>, vector<32x64xf32>, vector<8x64xf32> -> vector<8x64xf32>
    %c0_9 = arith.constant 0 : index
    %c0_10 = arith.constant 0 : index
    %10 = vector.load %arg5[%c0_9, %c0_10] : memref<1x64xf32, #tpu.memory_space<vmem>>, vector<1x64xf32>
    %11 = vector.broadcast %10 : vector<1x64xf32> to vector<8x64xf32>
    %12 = arith.addf %9, %11 : vector<8x64xf32>
    %cst_11 = arith.constant 0.000000e+00 : f32
    %13 = vector.broadcast %cst_11 : f32 to vector<8x64xf32>
    %14 = arith.maximumf %12, %13 : vector<8x64xf32>
    %c0_12 = arith.constant 0 : index
    %c0_13 = arith.constant 0 : index
    %15 = vector.load %arg6[%c0_12, %c0_13] : memref<64x32xf32, #tpu.memory_space<vmem>>, vector<64x32xf32>
    %cst_14 = arith.constant dense<0.000000e+00> : vector<8x32xf32>
    %16 = tpu.matmul %14, %15, %cst_14 {dimension_numbers = #tpu.dot_dimension_numbers<[1], [0], [0], [1], [0, 0, 1, 1], [], []>} : vector<8x64xf32>, vector<64x32xf32>, vector<8x32xf32> -> vector<8x32xf32>
    %c0_15 = arith.constant 0 : index
    %c0_16 = arith.constant 0 : index
    %17 = vector.load %arg7[%c0_15, %c0_16] : memref<1x32xf32, #tpu.memory_space<vmem>>, vector<1x32xf32>
    %18 = vector.broadcast %17 : vector<1x32xf32> to vector<8x32xf32>
    %19 = arith.addf %16, %18 : vector<8x32xf32>
    %cst_17 = arith.constant 0.000000e+00 : f32
    %20 = vector.broadcast %cst_17 : f32 to vector<8x32xf32>
    %21 = arith.maximumf %19, %20 : vector<8x32xf32>
    %c0_18 = arith.constant 0 : index
    %c0_19 = arith.constant 0 : index
    %22 = vector.load %arg8[%c0_18, %c0_19] : memref<32x36xf32, #tpu.memory_space<vmem>>, vector<32x36xf32>
    %cst_20 = arith.constant dense<0.000000e+00> : vector<8x36xf32>
    %23 = tpu.matmul %21, %22, %cst_20 {dimension_numbers = #tpu.dot_dimension_numbers<[1], [0], [0], [1], [0, 0, 1, 1], [], []>} : vector<8x32xf32>, vector<32x36xf32>, vector<8x36xf32> -> vector<8x36xf32>
    %c0_21 = arith.constant 0 : index
    %c0_22 = arith.constant 0 : index
    %24 = vector.load %arg9[%c0_21, %c0_22] : memref<1x36xf32, #tpu.memory_space<vmem>>, vector<1x36xf32>
    %25 = vector.broadcast %24 : vector<1x36xf32> to vector<8x36xf32>
    %26 = arith.addf %23, %25 : vector<8x36xf32>
    %cst_23 = arith.constant 0.000000e+00 : f32
    %27 = vector.broadcast %cst_23 : f32 to vector<8x36xf32>
    %28 = arith.maximumf %26, %27 : vector<8x36xf32>
    %c0_24 = arith.constant 0 : index
    %c0_25 = arith.constant 0 : index
    %29 = vector.load %arg10[%c0_24, %c0_25] : memref<8x36xf32, #tpu.memory_space<vmem>>, vector<8x36xf32>
    tpu.vector_store %arg10[%c0_24, %c0_25], %28 {strides = array<i32>} : memref<8x36xf32, #tpu.memory_space<vmem>>, vector<8x36xf32>,
    return
  }
  func.func @transform_0(%arg0: i32) -> (i32, i32) {
    %c0_i32 = arith.constant 0 : i32
    %c0_i32_0 = arith.constant 0 : i32
    return %arg0, %c0_i32 : i32, i32
  }
  func.func @transform_1(%arg0: i32) -> (i32, i32) {
    %c0_i32 = arith.constant 0 : i32
    %c0_i32_0 = arith.constant 0 : i32
    %c0_i32_1 = arith.constant 0 : i32
    return %c0_i32, %c0_i32_0 : i32, i32
  }
  func.func @transform_2(%arg0: i32) -> (i32, i32) {
    %c0_i32 = arith.constant 0 : i32
    %c0_i32_0 = arith.constant 0 : i32
    %c0_i32_1 = arith.constant 0 : i32
    return %c0_i32, %c0_i32_0 : i32, i32
  }
  func.func @transform_3(%arg0: i32) -> (i32, i32) {
    %c0_i32 = arith.constant 0 : i32
    %c0_i32_0 = arith.constant 0 : i32
    %c0_i32_1 = arith.constant 0 : i32
    return %c0_i32, %c0_i32_0 : i32, i32
  }
  func.func @transform_4(%arg0: i32) -> (i32, i32) {
    %c0_i32 = arith.constant 0 : i32
    %c0_i32_0 = arith.constant 0 : i32
    %c0_i32_1 = arith.constant 0 : i32
    return %c0_i32, %c0_i32_0 : i32, i32
  }
  func.func @transform_5(%arg0: i32) -> (i32, i32) {
    %c0_i32 = arith.constant 0 : i32
    %c0_i32_0 = arith.constant 0 : i32
    %c0_i32_1 = arith.constant 0 : i32
    return %c0_i32, %c0_i32_0 : i32, i32
  }
  func.func @transform_6(%arg0: i32) -> (i32, i32) {
    %c0_i32 = arith.constant 0 : i32
    %c0_i32_0 = arith.constant 0 : i32
    %c0_i32_1 = arith.constant 0 : i32
    return %c0_i32, %c0_i32_0 : i32, i32
  }
  func.func @transform_7(%arg0: i32) -> (i32, i32) {
    %c0_i32 = arith.constant 0 : i32
    %c0_i32_0 = arith.constant 0 : i32
    %c0_i32_1 = arith.constant 0 : i32
    return %c0_i32, %c0_i32_0 : i32, i32
  }
  func.func @transform_8(%arg0: i32) -> (i32, i32) {
    %c0_i32 = arith.constant 0 : i32
    %c0_i32_0 = arith.constant 0 : i32
    %c0_i32_1 = arith.constant 0 : i32
    return %c0_i32, %c0_i32_0 : i32, i32
  }
  func.func @transform_9(%arg0: i32) -> (i32, i32) {
    %c0_i32 = arith.constant 0 : i32
    %c0_i32_0 = arith.constant 0 : i32
    return %arg0, %c0_i32 : i32, i32
  }
}

</mosaic_0001>

<llo_original>
// kernel: dqn_forward.1
$region0: #{dqn_forward.1}
  #allocation0 [shape = 'u32[]', space=smem, size = 0x4, offset = 0x4, fixed_abs, tag = 'smem constant byte address 0x4 - core index']
  #allocation1 [shape = 'u32[144,128]{1,0:T(1,128)}', space=vmem, size = 0x12000, scoped, tag = 'internal scratch']
  %s0 = inlined_call_operand.vmem [shape: f32[2,8], index: 0, kind: input, shape index: {}]
  %s1 = inlined_call_operand.vmem [shape: f32[8,32], index: 1, kind: input, shape index: {}]
  %s2 = inlined_call_operand.vmem [shape: f32[1,32], index: 2, kind: input, shape index: {}]
  %s3 = inlined_call_operand.vmem [shape: f32[32,64], index: 3, kind: input, shape index: {}]
  %s4 = inlined_call_operand.vmem [shape: f32[1,64], index: 4, kind: input, shape index: {}]
  %s5 = inlined_call_operand.vmem [shape: f32[64,32], index: 5, kind: input, shape index: {}]
  %s6 = inlined_call_operand.vmem [shape: f32[1,32], index: 6, kind: input, shape index: {}]
  %s7 = inlined_call_operand.vmem [shape: f32[32,36], index: 7, kind: input, shape index: {}]
  %s8 = inlined_call_operand.vmem [shape: f32[1,36], index: 8, kind: input, shape index: {}]
  %s9 = inlined_call_operand.vmem [shape: f32[2,36], index: 9, kind: output, shape index: {}]
  %s10 = sld [smem:[#allocation0]]
  $region76: #{dqn_forward.1} parent=0
    _
  %s12 = ssub.s32 1, %s10
  %s13 = scalar_select 0, %s12, %s10
  $region1: #{dqn_forward.1} parent=0
    #allocation2 [shape = 'u8[4096]{0}', space=vmem, size = 0x1000, scoped, tag = 'output window, operand 0, single buffered']
    // Predicated region
    $region2: #{dqn_forward.1} parent=1 // pred_check
      _
    $region3: #{dqn_forward.1} parent=1 // pred_check_branch
      %15 = sbr.rel (0) target = $region5
    $region4: #{dqn_forward.1} parent=1 // pred_region
      _
    $region5: #{dqn_forward.1} parent=1 // pred_fallthru
      _
    // Predicated region
    $region6: #{dqn_forward.1} parent=1 // pred_check
      _
    $region7: #{dqn_forward.1} parent=1 // pred_check_branch
      %17 = sbr.rel (0) target = $region9
    $region8: #{dqn_forward.1} parent=1 // pred_region
      _
    $region9: #{dqn_forward.1} parent=1 // pred_fallthru
      _
    // Predicated region
    $region10: #{dqn_forward.1} parent=1 // pred_check
      _
    $region11: #{dqn_forward.1} parent=1 // pred_check_branch
      %19 = sbr.rel (0) target = $region13
    $region12: #{dqn_forward.1} parent=1 // pred_region
      _
    $region13: #{dqn_forward.1} parent=1 // pred_fallthru
      _
    // Predicated region
    $region14: #{dqn_forward.1} parent=1 // pred_check
      _
    $region15: #{dqn_forward.1} parent=1 // pred_check_branch
      %21 = sbr.rel (0) target = $region17
    $region16: #{dqn_forward.1} parent=1 // pred_region
      _
    $region17: #{dqn_forward.1} parent=1 // pred_fallthru
      _
    // Predicated region
    $region18: #{dqn_forward.1} parent=1 // pred_check
      _
    $region19: #{dqn_forward.1} parent=1 // pred_check_branch
      %23 = sbr.rel (0) target = $region21
    $region20: #{dqn_forward.1} parent=1 // pred_region
      _
    $region21: #{dqn_forward.1} parent=1 // pred_fallthru
      _
    // Predicated region
    $region22: #{dqn_forward.1} parent=1 // pred_check
      _
    $region23: #{dqn_forward.1} parent=1 // pred_check_branch
      %25 = sbr.rel (0) target = $region25
    $region24: #{dqn_forward.1} parent=1 // pred_region
      _
    $region25: #{dqn_forward.1} parent=1 // pred_fallthru
      _
    // Predicated region
    $region26: #{dqn_forward.1} parent=1 // pred_check
      _
    $region27: #{dqn_forward.1} parent=1 // pred_check_branch
      %27 = sbr.rel (0) target = $region29
    $region28: #{dqn_forward.1} parent=1 // pred_region
      _
    $region29: #{dqn_forward.1} parent=1 // pred_fallthru
      _
    // Predicated region
    $region30: #{dqn_forward.1} parent=1 // pred_check
      _
    $region31: #{dqn_forward.1} parent=1 // pred_check_branch
      %29 = sbr.rel (0) target = $region33
    $region32: #{dqn_forward.1} parent=1 // pred_region
      _
    $region33: #{dqn_forward.1} parent=1 // pred_fallthru
      _
    // Predicated region
    $region34: #{dqn_forward.1} parent=1 // pred_check
      _
    $region35: #{dqn_forward.1} parent=1 // pred_check_branch
      %31 = sbr.rel (0) target = $region37
    $region36: #{dqn_forward.1} parent=1 // pred_region
      _
    $region37: #{dqn_forward.1} parent=1 // pred_fallthru
      _
    %v32 = vld [vmem:[%s0] sm:$0xff]
    %v33 = vld [vmem:[%s1] sm:$0xff]
    %v34 = vld [vmem:[%s2] sm:$0x1]
    %v36 = vlaneseq
    %v37 = vshrl.u32 %v36, 7
    %v38 = vsub.s32 0, %v37
    %v39 = vrot.slane %v34, %v38
    %vm41 = vcmask 64512
    %v43 = vsel %vm41, %v32, 0
    %45 = vmatprep.subr.mxu0 0.0
    %46 = vmatpush1.msra.mxu0 %v33
    %47 = vmatprep.subr.mxu0 0.0
    %48 = vmatpush1.msra.mxu0 0.0
    %49 = vmatprep.subr.mxu0 0.0
    %50 = vmatpush1.msra.mxu0 0.0
    %51 = vmatprep.subr.mxu0 0.0
    %52 = vmatpush1.msra.mxu0 0.0
    %53 = vmatprep.subr.mxu0 0.0
    %54 = vmatpush1.msra.mxu0 0.0
    %55 = vmatprep.subr.mxu0 0.0
    %56 = vmatpush1.msra.mxu0 0.0
    %57 = vmatprep.subr.mxu0 0.0
    %58 = vmatpush1.msra.mxu0 0.0
    %59 = vmatprep.subr.mxu0 0.0
    %60 = vmatpush1.msra.mxu0 0.0
    %61 = vmatprep.subr.mxu0 0.0
    %62 = vmatpush1.msra.mxu0 0.0
    %63 = vmatprep.subr.mxu0 0.0
    %64 = vmatpush1.msra.mxu0 0.0
    %65 = vmatprep.subr.mxu0 0.0
    %66 = vmatpush1.msra.mxu0 0.0
    %67 = vmatprep.subr.mxu0 0.0
    %68 = vmatpush1.msra.mxu0 0.0
    %69 = vmatprep.subr.mxu0 0.0
    %70 = vmatpush1.msra.mxu0 0.0
    %71 = vmatprep.subr.mxu0 0.0
    %72 = vmatpush1.msra.mxu0 0.0
    %73 = vmatprep.subr.mxu0 0.0
    %74 = vmatpush1.msra.mxu0 0.0
    %75 = vmatprep.subr.mxu0 0.0
    %76 = vmatpush1.msra.mxu0 0.0
    %77 = vmatprep.subr.mxu0 0.0
    %78 = vmatpush1.msra.mxu0 0.0
    %79 = vmatprep.subr.mxu0 0.0
    %80 = vmatpush1.msra.mxu0 0.0
    %81 = vmatprep.subr.mxu0 0.0
    %82 = vmatpush1.msra.mxu0 0.0
    %83 = vmatprep.subr.mxu0 0.0
    %84 = vmatpush1.msra.mxu0 0.0
    %85 = vmatprep.subr.mxu0 0.0
    %86 = vmatpush1.msra.mxu0 0.0
    %87 = vmatprep.subr.mxu0 0.0
    %88 = vmatpush1.msra.mxu0 0.0
    %89 = vmatprep.subr.mxu0 0.0
    %90 = vmatpush1.msra.mxu0 0.0
    %91 = vmatprep.subr.mxu0 0.0
    %92 = vmatpush1.msra.mxu0 0.0
    %93 = vmatprep.subr.mxu0 0.0
    %94 = vmatpush1.msra.mxu0 0.0
    %95 = vmatprep.subr.mxu0 0.0
    %96 = vmatpush1.msra.mxu0 0.0
    %97 = vmatprep.subr.mxu0 0.0
    %98 = vmatpush1.msra.mxu0 0.0
    %99 = vmatprep.subr.mxu0 0.0
    %100 = vmatpush1.msra.mxu0 0.0
    %101 = vmatprep.subr.mxu0 0.0
    %102 = vmatpush1.msra.mxu0 0.0
    %103 = vmatprep.subr.mxu0 0.0
    %104 = vmatpush1.msra.mxu0 0.0
    %105 = vmatprep.subr.mxu0 0.0
    %106 = vmatpush1.msra.mxu0 0.0
    %107 = vmatprep.subr.mxu0 0.0
    %108 = vmatpush1.msra.mxu0 0.0
    %109 = vmatprep.mubr.f32.mxu0 0.0
    %110 = vmatmul.mubr.f32.gmra.mrb[0].mxu0 %v43
    %v111 = vpop.f32.mrb[0].mxu0
    %v112 = vadd.f32 %v39, %v111
    %v113 = vpop.f32.mrb[0].mxu0
    %114 = vdwg.mxu0
    %v115 = vmax.f32 %v112, 0.0
    %v116 = vld [vmem:[%s3] sm:$0xff]
    %v117 = vld [vmem:[%s3 + $0x8] sm:$0xff]
    %v118 = vld [vmem:[%s3 + $0x10] sm:$0xff]
    %v119 = vld [vmem:[%s3 + $0x18] sm:$0xff]
    %v120 = vld [vmem:[%s4] sm:$0x1]
    %v122 = vlaneseq
    %v123 = vshrl.u32 %v122, 7
    %v124 = vsub.s32 0, %v123
    %v125 = vrot.slane %v120, %v124
    %vm127 = vcmask 261120
    %v129 = vsel %vm127, %v115, 0
    %131 = vmatprep.subr.mxu0 0.0
    %132 = vmatpush1.msra.mxu0 %v116
    %133 = vmatprep.subr.mxu0 0.0
    %134 = vmatpush1.msra.mxu0 %v117
    %135 = vmatprep.subr.mxu0 0.0
    %136 = vmatpush1.msra.mxu0 %v118
    %137 = vmatprep.subr.mxu0 0.0
    %138 = vmatpush1.msra.mxu0 %v119
    %139 = vmatprep.subr.mxu0 0.0
    %140 = vmatpush1.msra.mxu0 0.0
    %141 = vmatprep.subr.mxu0 0.0
    %142 = vmatpush1.msra.mxu0 0.0
    %143 = vmatprep.subr.mxu0 0.0
    %144 = vmatpush1.msra.mxu0 0.0
    %145 = vmatprep.subr.mxu0 0.0
    %146 = vmatpush1.msra.mxu0 0.0
    %147 = vmatprep.subr.mxu0 0.0
    %148 = vmatpush1.msra.mxu0 0.0
    %149 = vmatprep.subr.mxu0 0.0
    %150 = vmatpush1.msra.mxu0 0.0
    %151 = vmatprep.subr.mxu0 0.0
    %152 = vmatpush1.msra.mxu0 0.0
    %153 = vmatprep.subr.mxu0 0.0
    %154 = vmatpush1.msra.mxu0 0.0
    %155 = vmatprep.subr.mxu0 0.0
    %156 = vmatpush1.msra.mxu0 0.0
    %157 = vmatprep.subr.mxu0 0.0
    %158 = vmatpush1.msra.mxu0 0.0
    %159 = vmatprep.subr.mxu0 0.0
    %160 = vmatpush1.msra.mxu0 0.0
    %161 = vmatprep.subr.mxu0 0.0
    %162 = vmatpush1.msra.mxu0 0.0
    %163 = vmatprep.subr.mxu0 0.0
    %164 = vmatpush1.msra.mxu0 0.0
    %165 = vmatprep.subr.mxu0 0.0
    %166 = vmatpush1.msra.mxu0 0.0
    %167 = vmatprep.subr.mxu0 0.0
    %168 = vmatpush1.msra.mxu0 0.0
    %169 = vmatprep.subr.mxu0 0.0
    %170 = vmatpush1.msra.mxu0 0.0
    %171 = vmatprep.subr.mxu0 0.0
    %172 = vmatpush1.msra.mxu0 0.0
    %173 = vmatprep.subr.mxu0 0.0
    %174 = vmatpush1.msra.mxu0 0.0
    %175 = vmatprep.subr.mxu0 0.0
    %176 = vmatpush1.msra.mxu0 0.0
    %177 = vmatprep.subr.mxu0 0.0
    %178 = vmatpush1.msra.mxu0 0.0
    %179 = vmatprep.subr.mxu0 0.0
    %180 = vmatpush1.msra.mxu0 0.0
    %181 = vmatprep.subr.mxu0 0.0
    %182 = vmatpush1.msra.mxu0 0.0
    %183 = vmatprep.subr.mxu0 0.0
    %184 = vmatpush1.msra.mxu0 0.0
    %185 = vmatprep.subr.mxu0 0.0
    %186 = vmatpush1.msra.mxu0 0.0
    %187 = vmatprep.subr.mxu0 0.0
    %188 = vmatpush1.msra.mxu0 0.0
    %189 = vmatprep.subr.mxu0 0.0
    %190 = vmatpush1.msra.mxu0 0.0
    %191 = vmatprep.subr.mxu0 0.0
    %192 = vmatpush1.msra.mxu0 0.0
    %193 = vmatprep.subr.mxu0 0.0
    %194 = vmatpush1.msra.mxu0 0.0
    %195 = vmatprep.mubr.f32.mxu0 0.0
    %196 = vmatmul.mubr.f32.gmra.mrb[0].mxu0 %v129
    %v197 = vpop.f32.mrb[0].mxu0
    %v198 = vadd.f32 %v125, %v197
    %v199 = vpop.f32.mrb[0].mxu0
    %200 = vdwg.mxu0
    %v201 = vmax.f32 %v198, 0.0
    %v202 = vld [vmem:[%s5] sm:$0xff]
    %v203 = vld [vmem:[%s5 + $0x8] sm:$0xff]
    %v204 = vld [vmem:[%s5 + $0x10] sm:$0xff]
    %v205 = vld [vmem:[%s5 + $0x18] sm:$0xff]
    %v206 = vld [vmem:[%s5 + $0x20] sm:$0xff]
    %v207 = vld [vmem:[%s5 + $0x28] sm:$0xff]
    %v208 = vld [vmem:[%s5 + $0x30] sm:$0xff]
    %v209 = vld [vmem:[%s5 + $0x38] sm:$0xff]
    %v210 = vld [vmem:[%s6] sm:$0x1]
    %v212 = vlaneseq
    %v213 = vshrl.u32 %v212, 7
    %v214 = vsub.s32 0, %v213
    %v215 = vrot.slane %v210, %v214
    %vm217 = vcmask 523264
    %v219 = vsel %vm217, %v201, 0
    %221 = vmatprep.subr.mxu0 0.0
    %222 = vmatpush1.msra.mxu0 %v202
    %223 = vmatprep.subr.mxu0 0.0
    %224 = vmatpush1.msra.mxu0 %v203
    %225 = vmatprep.subr.mxu0 0.0
    %226 = vmatpush1.msra.mxu0 %v204
    %227 = vmatprep.subr.mxu0 0.0
    %228 = vmatpush1.msra.mxu0 %v205
    %229 = vmatprep.subr.mxu0 0.0
    %230 = vmatpush1.msra.mxu0 %v206
    %231 = vmatprep.subr.mxu0 0.0
    %232 = vmatpush1.msra.mxu0 %v207
    %233 = vmatprep.subr.mxu0 0.0
    %234 = vmatpush1.msra.mxu0 %v208
    %235 = vmatprep.subr.mxu0 0.0
    %236 = vmatpush1.msra.mxu0 %v209
    %237 = vmatprep.subr.mxu0 0.0
    %238 = vmatpush1.msra.mxu0 0.0
    %239 = vmatprep.subr.mxu0 0.0
    %240 = vmatpush1.msra.mxu0 0.0
    %241 = vmatprep.subr.mxu0 0.0
    %242 = vmatpush1.msra.mxu0 0.0
    %243 = vmatprep.subr.mxu0 0.0
    %244 = vmatpush1.msra.mxu0 0.0
    %245 = vmatprep.subr.mxu0 0.0
    %246 = vmatpush1.msra.mxu0 0.0
    %247 = vmatprep.subr.mxu0 0.0
    %248 = vmatpush1.msra.mxu0 0.0
    %249 = vmatprep.subr.mxu0 0.0
    %250 = vmatpush1.msra.mxu0 0.0
    %251 = vmatprep.subr.mxu0 0.0
    %252 = vmatpush1.msra.mxu0 0.0
    %253 = vmatprep.subr.mxu0 0.0
    %254 = vmatpush1.msra.mxu0 0.0
    %255 = vmatprep.subr.mxu0 0.0
    %256 = vmatpush1.msra.mxu0 0.0
    %257 = vmatprep.subr.mxu0 0.0
    %258 = vmatpush1.msra.mxu0 0.0
    %259 = vmatprep.subr.mxu0 0.0
    %260 = vmatpush1.msra.mxu0 0.0
    %261 = vmatprep.subr.mxu0 0.0
    %262 = vmatpush1.msra.mxu0 0.0
    %263 = vmatprep.subr.mxu0 0.0
    %264 = vmatpush1.msra.mxu0 0.0
    %265 = vmatprep.subr.mxu0 0.0
    %266 = vmatpush1.msra.mxu0 0.0
    %267 = vmatprep.subr.mxu0 0.0
    %268 = vmatpush1.msra.mxu0 0.0
    %269 = vmatprep.subr.mxu0 0.0
    %270 = vmatpush1.msra.mxu0 0.0
    %271 = vmatprep.subr.mxu0 0.0
    %272 = vmatpush1.msra.mxu0 0.0
    %273 = vmatprep.subr.mxu0 0.0
    %274 = vmatpush1.msra.mxu0 0.0
    %275 = vmatprep.subr.mxu0 0.0
    %276 = vmatpush1.msra.mxu0 0.0
    %277 = vmatprep.subr.mxu0 0.0
    %278 = vmatpush1.msra.mxu0 0.0
    %279 = vmatprep.subr.mxu0 0.0
    %280 = vmatpush1.msra.mxu0 0.0
    %281 = vmatprep.subr.mxu0 0.0
    %282 = vmatpush1.msra.mxu0 0.0
    %283 = vmatprep.subr.mxu0 0.0
    %284 = vmatpush1.msra.mxu0 0.0
    %285 = vmatprep.mubr.f32.mxu0 0.0
    %286 = vmatmul.mubr.f32.gmra.mrb[0].mxu0 %v219
    %v287 = vpop.f32.mrb[0].mxu0
    %v288 = vadd.f32 %v215, %v287
    %v289 = vpop.f32.mrb[0].mxu0
    %290 = vdwg.mxu0
    %v291 = vmax.f32 %v288, 0.0
    %v292 = vld [vmem:[%s7] sm:$0xff]
    %v293 = vld [vmem:[%s7 + $0x8] sm:$0xff]
    %v294 = vld [vmem:[%s7 + $0x10] sm:$0xff]
    %v295 = vld [vmem:[%s7 + $0x18] sm:$0xff]
    %v296 = vld [vmem:[%s8] sm:$0x1]
    %v298 = vlaneseq
    %v299 = vshrl.u32 %v298, 7
    %v300 = vsub.s32 0, %v299
    %v301 = vrot.slane %v296, %v300
    %v304 = vsel %vm127, %v291, 0
    %306 = vmatprep.subr.mxu0 0.0
    %307 = vmatpush1.msra.mxu0 %v292
    %308 = vmatprep.subr.mxu0 0.0
    %309 = vmatpush1.msra.mxu0 %v293
    %310 = vmatprep.subr.mxu0 0.0
    %311 = vmatpush1.msra.mxu0 %v294
    %312 = vmatprep.subr.mxu0 0.0
    %313 = vmatpush1.msra.mxu0 %v295
    %314 = vmatprep.subr.mxu0 0.0
    %315 = vmatpush1.msra.mxu0 0.0
    %316 = vmatprep.subr.mxu0 0.0
    %317 = vmatpush1.msra.mxu0 0.0
    %318 = vmatprep.subr.mxu0 0.0
    %319 = vmatpush1.msra.mxu0 0.0
    %320 = vmatprep.subr.mxu0 0.0
    %321 = vmatpush1.msra.mxu0 0.0
    %322 = vmatprep.subr.mxu0 0.0
    %323 = vmatpush1.msra.mxu0 0.0
    %324 = vmatprep.subr.mxu0 0.0
    %325 = vmatpush1.msra.mxu0 0.0
    %326 = vmatprep.subr.mxu0 0.0
    %327 = vmatpush1.msra.mxu0 0.0
    %328 = vmatprep.subr.mxu0 0.0
    %329 = vmatpush1.msra.mxu0 0.0
    %330 = vmatprep.subr.mxu0 0.0
    %331 = vmatpush1.msra.mxu0 0.0
    %332 = vmatprep.subr.mxu0 0.0
    %333 = vmatpush1.msra.mxu0 0.0
    %334 = vmatprep.subr.mxu0 0.0
    %335 = vmatpush1.msra.mxu0 0.0
    %336 = vmatprep.subr.mxu0 0.0
    %337 = vmatpush1.msra.mxu0 0.0
    %338 = vmatprep.subr.mxu0 0.0
    %339 = vmatpush1.msra.mxu0 0.0
    %340 = vmatprep.subr.mxu0 0.0
    %341 = vmatpush1.msra.mxu0 0.0
    %342 = vmatprep.subr.mxu0 0.0
    %343 = vmatpush1.msra.mxu0 0.0
    %344 = vmatprep.subr.mxu0 0.0
    %345 = vmatpush1.msra.mxu0 0.0
    %346 = vmatprep.subr.mxu0 0.0
    %347 = vmatpush1.msra.mxu0 0.0
    %348 = vmatprep.subr.mxu0 0.0
    %349 = vmatpush1.msra.mxu0 0.0
    %350 = vmatprep.subr.mxu0 0.0
    %351 = vmatpush1.msra.mxu0 0.0
    %352 = vmatprep.subr.mxu0 0.0
    %353 = vmatpush1.msra.mxu0 0.0
    %354 = vmatprep.subr.mxu0 0.0
    %355 = vmatpush1.msra.mxu0 0.0
    %356 = vmatprep.subr.mxu0 0.0
    %357 = vmatpush1.msra.mxu0 0.0
    %358 = vmatprep.subr.mxu0 0.0
    %359 = vmatpush1.msra.mxu0 0.0
    %360 = vmatprep.subr.mxu0 0.0
    %361 = vmatpush1.msra.mxu0 0.0
    %362 = vmatprep.subr.mxu0 0.0
    %363 = vmatpush1.msra.mxu0 0.0
    %364 = vmatprep.subr.mxu0 0.0
    %365 = vmatpush1.msra.mxu0 0.0
    %366 = vmatprep.subr.mxu0 0.0
    %367 = vmatpush1.msra.mxu0 0.0
    %368 = vmatprep.subr.mxu0 0.0
    %369 = vmatpush1.msra.mxu0 0.0
    %370 = vmatprep.mubr.f32.mxu0 0.0
    %371 = vmatmul.mubr.f32.gmra.mrb[0].mxu0 %v304
    %v372 = vpop.f32.mrb[0].mxu0
    %v373 = vadd.f32 %v301, %v372
    %v374 = vpop.f32.mrb[0].mxu0
    %375 = vdwg.mxu0
    %v376 = vmax.f32 %v373, 0.0
    %vm377 = vcmask 293888
    %378 = vst.msk [vmem:[#allocation2] sm:$0xff] %vm377, %v376
    // Predicated region
    $region38: #{dqn_forward.1} parent=1 // pred_check
      _
    $region39: #{dqn_forward.1} parent=1 // pred_check_branch
      %380 = sbr.rel (0) target = $region41
    $region40: #{dqn_forward.1} parent=1 // pred_region
      // Predicated region
      $region42: #{dqn_forward.1} parent=40 // pred_check
        _
      $region43: #{dqn_forward.1} parent=40 // pred_check_branch
        %382 = sbr.rel (0) target = $region45
      $region44: #{dqn_forward.1} parent=40 // pred_region
        // Predicated region
        $region46: #{dqn_forward.1} parent=44 // pred_check
          _
        $region47: #{dqn_forward.1} parent=44 // pred_check_branch
          %384 = sbr.rel target = $region49
        $region48: #{dqn_forward.1} parent=44 // pred_region
          // Predicated region
          $region61: #{dqn_forward.1} parent=48 // pred_check
            _
          $region62: #{dqn_forward.1} parent=48 // pred_check_branch
            %399 = sbr.rel (0) target = $region64
          $region63: #{dqn_forward.1} parent=48 // pred_region
            loop: start=0, step=1, limit=1
            $region65: #{dqn_forward.1} parent=63 // loop_pre_header
              _
            $region66: #{dqn_forward.1} parent=63 // loop_header
              %s402 = sphi 0, %s406
              %p403 = scmp.ge.s32.totalorder %s402, 1
              %s407 = sphi [#allocation2], [#allocation2]
              %s408 = sphi %s9, %s9
            $region67: #{dqn_forward.1} parent=63 // loop_header_branch
              %405 = sbr.rel (%p403) target = $region71
            $region68: #{dqn_forward.1} parent=63 // loop_body
              %v409 = vld [vmem:[%s407] sm:$0x3]
              %410 = vst [vmem:[%s408] sm:$0x3] %v409
            $region69: #{dqn_forward.1} parent=63 // loop_footer
              %s406 = sadd.s32 1, %s402
            $region70: #{dqn_forward.1} parent=63 // loop_footer_branch
              %401 = sbr.rel target = $region66
            $region71: #{dqn_forward.1} parent=63 // loop_exit
              _
          $region64: #{dqn_forward.1} parent=48 // pred_fallthru
            _
        $region49: #{dqn_forward.1} parent=44 // pred_fallthru
          _
        // Predicated region
        $region50: #{dqn_forward.1} parent=44 // pred_check
          _
        $region51: #{dqn_forward.1} parent=44 // pred_check_branch
          %386 = sbr.rel (0) target = $region53
        $region52: #{dqn_forward.1} parent=44 // pred_region
          loop: start=0, step=1, limit=1
          $region54: #{dqn_forward.1} parent=52 // loop_pre_header
            _
          $region55: #{dqn_forward.1} parent=52 // loop_header
            %s389 = sphi 0, %s393
            %p390 = scmp.ge.s32.totalorder %s389, 1
            %s394 = sphi [#allocation2], [#allocation2]
            %s395 = sphi %s9, %s9
          $region56: #{dqn_forward.1} parent=52 // loop_header_branch
            %392 = sbr.rel (%p390) target = $region60
          $region57: #{dqn_forward.1} parent=52 // loop_body
            %v396 = vld [vmem:[%s394] sm:$0x3]
            %397 = vst [vmem:[%s395] sm:$0x3] %v396
          $region58: #{dqn_forward.1} parent=52 // loop_footer
            %s393 = sadd.s32 1, %s389
          $region59: #{dqn_forward.1} parent=52 // loop_footer_branch
            %388 = sbr.rel target = $region55
          $region60: #{dqn_forward.1} parent=52 // loop_exit
            _
        $region53: #{dqn_forward.1} parent=44 // pred_fallthru
          _
      $region45: #{dqn_forward.1} parent=40 // pred_fallthru
        _
      %411 = vnop
    $region41: #{dqn_forward.1} parent=1 // pred_fallthru
      _
    // Predicated region
    $region72: #{dqn_forward.1} parent=1 // pred_check
      _
    $region73: #{dqn_forward.1} parent=1 // pred_check_branch
      %413 = sbr.rel (0) target = $region75
    $region74: #{dqn_forward.1} parent=1 // pred_region
      _
    $region75: #{dqn_forward.1} parent=1 // pred_fallthru
      _

</llo_original>
